<compile_context>
chip_gen: v6e
topology: v6e:2x2x1
jax: 0.10.0
libtpu: 0.0.40
codegen_flags: <defaults>
</compile_context>

<pallas_src>
import functools

import jax
import jax.numpy as jnp
from jax import lax
from jax.experimental import pallas as pl
from jax.experimental.pallas import tpu as pltpu


def _conv_relu_wide(x_ref, w_ref, b_ref, *, n_adj, mxu_dtype):
    """ReLU(circular_conv1d(x) + b) for one (TN, C_in, L) input tile.

    Returns a (C_out, TN*L) float32 array; sample i occupies lanes
    [i*L, (i+1)*L), so stores/reductions stay 128-aligned when L % 128 == 0.
    """
    tn, c_in, l = x_ref.shape
    k_taps = 2 * n_adj + 1

    x_t = x_ref[...]
    if mxu_dtype is not None and x_t.dtype != mxu_dtype:
        x_t = x_t.astype(mxu_dtype)

    # Per-sample 2-D slabs (leading-dim slices, no data movement).
    samples = [x_t[i] for i in range(tn)]                    # each (C_in, L)

    # K circularly shifted copies (XLU lane rotations -- no padded halo, no
    # lane-misaligned slices), k-major along the contraction axis, samples
    # batched along lanes -> ONE MXU dot per grid step.
    rows = []
    for k in range(k_taps):
        shift = (n_adj - k) % l
        shifted = [s if shift == 0 else pltpu.roll(s, shift=shift, axis=1)
                   for s in samples]
        rows.append(shifted[0] if tn == 1
                    else jnp.concatenate(shifted, axis=-1))  # (C_in, TN*L)
    xs = jnp.concatenate(rows, axis=0)                       # (K*C_in, TN*L)

    w = w_ref[...]                                           # (C_out, K*C_in)
    if mxu_dtype is not None and w.dtype != mxu_dtype:
        w = w.astype(mxu_dtype)

    y = jnp.dot(w, xs, preferred_element_type=jnp.float32)   # (C_out, TN*L)
    y = y + b_ref[...].astype(jnp.float32)                   # bias (f32 VPU)
    return jnp.maximum(y, 0.0)                               # ReLU


def _stats_kernel(x_ref, w_ref, b_ref, stats_ref, *, n_adj, mxu_dtype):
    """Pass 1: per-tile per-channel [sum, sum-of-squares] of ReLU(conv+b)."""
    y = _conv_relu_wide(x_ref, w_ref, b_ref, n_adj=n_adj, mxu_dtype=mxu_dtype)
    s = jnp.sum(y, axis=-1, keepdims=True)                   # (C_out, 1)
    q = jnp.sum(y * y, axis=-1, keepdims=True)               # (C_out, 1)
    stats_ref[0] = jnp.concatenate([s, q], axis=-1)          # (C_out, 2)


def _apply_kernel(x_ref, w_ref, b_ref, scale_ref, shift_ref, out_ref,
                  *, n_adj, mxu_dtype):
    """Pass 2: recompute ReLU(conv+b) and apply the folded BatchNorm affine."""
    tn, _, l = out_ref.shape
    y = _conv_relu_wide(x_ref, w_ref, b_ref, n_adj=n_adj, mxu_dtype=mxu_dtype)
    y = y * scale_ref[...] + shift_ref[...]                  # folded BN, f32
    for i in range(tn):                                      # static 128-aligned slices
        out_ref[i] = y[:, i * l:(i + 1) * l].astype(out_ref.dtype)


def _pick_tile_n(n, c_in, c_out, l, k_taps, budget_bytes, min_steps=4):
    """Largest N-tile that fits the VMEM budget while keeping >= min_steps
    grid steps when possible (2 TensorCores x >=2 steps each on v7x)."""
    # Rough f32 per-sample footprint of one grid step: double-buffered x and
    # out blocks, K rolled taps + lane-wide stack, and the f32 conv result.
    per_sample = 4 * l * (2 * c_in + 2 * c_out + 2 * k_taps * c_in + c_out)
    divisors = [d for d in range(1, n + 1) if n % d == 0]
    fits = [d for d in divisors if d * per_sample <= budget_bytes] or [1]
    for steps in (min_steps, 2, 1):
        pref = [d for d in fits if n // d >= steps]
        if pref:
            return max(pref)
    return 1


def snake_block(x, weight, bias, gamma, beta, *, n_adj=1, eps=1e-5,
                mxu_dtype=None, vmem_budget_bytes=24 << 20,
                vmem_limit_bytes=None):
    """SnakeBlock forward.

    x: (N, C_in, L); weight: (C_out, C_in, 2*n_adj+1); bias/gamma/beta: (C_out,).
    mxu_dtype=jnp.bfloat16 feeds the MXU bf16 operands (f32 accumulation).
    """
    n, c_in, l = x.shape
    c_out, c_in_w, k_taps = weight.shape
    assert c_in_w == c_in and k_taps == 2 * n_adj + 1 and n_adj < l

    tn = _pick_tile_n(n, c_in, c_out, l, k_taps, vmem_budget_bytes)
    nt = n // tn

    # (C_out, C_in, K) -> (C_out, K*C_in), k-major to match the in-kernel stack.
    w_flat = jnp.transpose(weight, (0, 2, 1)).reshape(c_out, k_taps * c_in)
    if mxu_dtype is not None:
        w_flat = w_flat.astype(mxu_dtype)
    b_col = bias.reshape(c_out, 1).astype(jnp.float32)

    cp = pltpu.CompilerParams(dimension_semantics=("parallel",),
                              vmem_limit_bytes=vmem_limit_bytes)

    # Pass 1: BN partial statistics only (no activation written to HBM).
    stats = pl.pallas_call(
        functools.partial(_stats_kernel, n_adj=n_adj, mxu_dtype=mxu_dtype),
        grid=(nt,),
        in_specs=[
            pl.BlockSpec((tn, c_in, l), lambda i: (i, 0, 0)),
            pl.BlockSpec((c_out, k_taps * c_in), lambda i: (0, 0)),
            pl.BlockSpec((c_out, 1), lambda i: (0, 0)),
        ],
        out_specs=pl.BlockSpec((1, c_out, 2), lambda i: (i, 0, 0)),
        out_shape=jax.ShapeDtypeStruct((nt, c_out, 2), jnp.float32),
        compiler_params=cp,
    )(x, w_flat, b_col)

    # Tiny cross-tile reduction; fold BatchNorm (training-mode, biased var)
    # into a per-channel scale/shift.
    cnt = float(n * l)
    tot = jnp.sum(stats, axis=0)                             # (C_out, 2)
    mean = tot[:, 0] / cnt
    var = jnp.maximum(tot[:, 1] / cnt - mean * mean, 0.0)
    inv = lax.rsqrt(var + eps)
    scale = gamma.astype(jnp.float32) * inv
    shift = beta.astype(jnp.float32) - mean * scale

    # Pass 2: recompute conv+ReLU (MXU-cheap) and write the final output.
    return pl.pallas_call(
        functools.partial(_apply_kernel, n_adj=n_adj, mxu_dtype=mxu_dtype),
        grid=(nt,),
        in_specs=[
            pl.BlockSpec((tn, c_in, l), lambda i: (i, 0, 0)),
            pl.BlockSpec((c_out, k_taps * c_in), lambda i: (0, 0)),
            pl.BlockSpec((c_out, 1), lambda i: (0, 0)),
            pl.BlockSpec((c_out, 1), lambda i: (0, 0)),
            pl.BlockSpec((c_out, 1), lambda i: (0, 0)),
        ],
        out_specs=pl.BlockSpec((tn, c_out, l), lambda i: (i, 0, 0)),
        out_shape=jax.ShapeDtypeStruct((n, c_out, l), x.dtype),
        compiler_params=cp,
    )(x, w_flat, b_col, scale.reshape(c_out, 1), shift.reshape(c_out, 1))


def _reference(x, weight, bias, gamma, beta, *, n_adj=1, eps=1e-5):
    """Pure-JAX reference of SnakeBlock.forward (training-mode BatchNorm)."""
    x_pad = jnp.concatenate([x[..., -n_adj:], x, x[..., :n_adj]], axis=2)
    y = lax.conv_general_dilated(
        x_pad, weight, window_strides=(1,), padding="VALID",
        dimension_numbers=("NCH", "OIH", "NCH"),
        precision=lax.Precision.HIGHEST)
    y = y + bias[None, :, None]
    y = jnp.maximum(y, 0.0)
    mean = jnp.mean(y, axis=(0, 2), keepdims=True)
    var = jnp.mean((y - mean) ** 2, axis=(0, 2), keepdims=True)
    y = (y - mean) / jnp.sqrt(var + eps)
    return y * gamma[None, :, None] + beta[None, :, None]


if __name__ == "__main__":
    # Small shapes in the module's (num_center, state_dim, n_pts) convention;
    # L is a multiple of 128 so all stores / lane-concats are lane-dense.
    N, C_IN, C_OUT, L, N_ADJ = 8, 16, 32, 128, 1
    K = 2 * N_ADJ + 1

    key = jax.random.PRNGKey(0)
    kx, kw, kb, kg, kbeta = jax.random.split(key, 5)

    x = jax.random.normal(kx, (N, C_IN, L), dtype=jnp.float32)
    weight = jax.random.normal(kw, (C_OUT, C_IN, K), dtype=jnp.float32) * 0.1
    bias = jax.random.normal(kb, (C_OUT,), dtype=jnp.float32) * 0.1
    gamma = 1.0 + 0.1 * jax.random.normal(kg, (C_OUT,), dtype=jnp.float32)
    beta = 0.1 * jax.random.normal(kbeta, (C_OUT,), dtype=jnp.float32)

    ref = _reference(x, weight, bias, gamma, beta, n_adj=N_ADJ)

    # f32 MXU operands: matches the PyTorch module's numerics.
    # `adj` is accepted by CircConv.forward but never used -> not passed.
    out = jax.block_until_ready(
        snake_block(x, weight, bias, gamma, beta, n_adj=N_ADJ))
    assert out.shape == (N, C_OUT, L) and out.dtype == x.dtype
    err = float(jnp.max(jnp.abs(out - ref)))
    assert jnp.allclose(out, ref, atol=1e-3, rtol=1e-3), err

    # bf16 MXU operands (perf-review fast path); looser tolerance since the
    # reference conv runs at Precision.HIGHEST.
    out_bf16 = jax.block_until_ready(
        snake_block(x, weight, bias, gamma, beta, n_adj=N_ADJ,
                    mxu_dtype=jnp.bfloat16))
    err_bf16 = float(jnp.max(jnp.abs(out_bf16 - ref)))
    assert jnp.allclose(out_bf16, ref, atol=5e-2, rtol=5e-2), err_bf16

    print("KERNEL_OK")
</pallas_src>

<mosaic_0001>
module attributes {stable_mosaic.version = 11 : i64} {
  func.func @_stats_kernel(%arg0: i32, %arg1: memref<2x16x128xf32, #tpu.memory_space<vmem>>, %arg2: memref<32x48xf32, #tpu.memory_space<vmem>>, %arg3: memref<32x1xf32, #tpu.memory_space<vmem>>, %arg4: memref<1x32x2xf32, #tpu.memory_space<vmem>>) attributes {dimension_semantics = [#tpu.dimension_semantics<parallel>], iteration_bounds = array<i64: 4>, scalar_prefetch = 0 : i64, scratch_operands = 0 : i64, tpu.core_type = #tpu.core_type<tc>, window_params = [{transform_indices = @transform_0, window_bounds = array<i64: 2, 16, 128>}, {pipeline_mode = #tpu.pipeline_mode<synchronous>, transform_indices = @transform_1, window_bounds = array<i64: 32, 48>}, {pipeline_mode = #tpu.pipeline_mode<synchronous>, transform_indices = @transform_2, window_bounds = array<i64: 32, 1>}, {transform_indices = @transform_3, window_bounds = array<i64: 1, 32, 2>}]} {
    %c0 = arith.constant 0 : index
    %c0_0 = arith.constant 0 : index
    %c0_1 = arith.constant 0 : index
    %0 = vector.load %arg1[%c0, %c0_0, %c0_1] : memref<2x16x128xf32, #tpu.memory_space<vmem>>, vector<2x16x128xf32>
    %1 = vector.extract_strided_slice %0 {offsets = [0, 0, 0], sizes = [1, 16, 128], strides = [1, 1, 1]} : vector<2x16x128xf32> to vector<1x16x128xf32>
    %2 = vector.shape_cast %1 : vector<1x16x128xf32> to vector<16x128xf32>
    %3 = vector.extract_strided_slice %0 {offsets = [1, 0, 0], sizes = [1, 16, 128], strides = [1, 1, 1]} : vector<2x16x128xf32> to vector<1x16x128xf32>
    %4 = vector.shape_cast %3 : vector<1x16x128xf32> to vector<16x128xf32>
    %c1_i32 = arith.constant 1 : i32
    %5 = tpu.dynamic_rotate %2 by %c1_i32 dim 1 : vector<16x128xf32>, i32 -> vector<16x128xf32>
    %c1_i32_2 = arith.constant 1 : i32
    %6 = tpu.dynamic_rotate %4 by %c1_i32_2 dim 1 : vector<16x128xf32>, i32 -> vector<16x128xf32>
    %7 = tpu.concatenate %5, %6 in 1 : vector<16x128xf32>, vector<16x128xf32> -> vector<16x256xf32>
    %8 = tpu.concatenate %2, %4 in 1 : vector<16x128xf32>, vector<16x128xf32> -> vector<16x256xf32>
    %c127_i32 = arith.constant 127 : i32
    %9 = tpu.dynamic_rotate %2 by %c127_i32 dim 1 : vector<16x128xf32>, i32 -> vector<16x128xf32>
    %c127_i32_3 = arith.constant 127 : i32
    %10 = tpu.dynamic_rotate %4 by %c127_i32_3 dim 1 : vector<16x128xf32>, i32 -> vector<16x128xf32>
    %11 = tpu.concatenate %9, %10 in 1 : vector<16x128xf32>, vector<16x128xf32> -> vector<16x256xf32>
    %12 = tpu.concatenate %7, %8, %11 in 0 : vector<16x256xf32>, vector<16x256xf32>, vector<16x256xf32> -> vector<48x256xf32>
    %c0_4 = arith.constant 0 : index
    %c0_5 = arith.constant 0 : index
    %13 = vector.load %arg2[%c0_4, %c0_5] : memref<32x48xf32, #tpu.memory_space<vmem>>, vector<32x48xf32>
    %cst = arith.constant dense<0.000000e+00> : vector<32x256xf32>
    %14 = tpu.matmul %13, %12, %cst {dimension_numbers = #tpu.dot_dimension_numbers<[1], [0], [0], [1], [0, 0, 1, 1], [], []>} : vector<32x48xf32>, vector<48x256xf32>, vector<32x256xf32> -> vector<32x256xf32>
    %c0_6 = arith.constant 0 : index
    %c0_7 = arith.constant 0 : index
    %15 = vector.load %arg3[%c0_6, %c0_7] : memref<32x1xf32, #tpu.memory_space<vmem>>, vector<32x1xf32>
    %16 = vector.broadcast %15 : vector<32x1xf32> to vector<32x256xf32>
    %17 = arith.addf %14, %16 : vector<32x256xf32>
    %cst_8 = arith.constant 0.000000e+00 : f32
    %18 = vector.broadcast %cst_8 : f32 to vector<32x256xf32>
    %19 = arith.maximumf %17, %18 : vector<32x256xf32>
    %cst_9 = arith.constant dense<0.000000e+00> : vector<32xf32>
    %20 = vector.multi_reduction <add>, %19, %cst_9 [1] : vector<32x256xf32> to vector<32xf32>
    %21 = vector.shape_cast %20 : vector<32xf32> to vector<32x1xf32>
    %22 = arith.mulf %19, %19 : vector<32x256xf32>
    %cst_10 = arith.constant dense<0.000000e+00> : vector<32xf32>
    %23 = vector.multi_reduction <add>, %22, %cst_10 [1] : vector<32x256xf32> to vector<32xf32>
    %24 = vector.shape_cast %23 : vector<32xf32> to vector<32x1xf32>
    %25 = tpu.concatenate %21, %24 in 1 : vector<32x1xf32>, vector<32x1xf32> -> vector<32x2xf32>
    %c0_11 = arith.constant 0 : index
    %c0_12 = arith.constant 0 : index
    %c0_13 = arith.constant 0 : index
    %26 = vector.load %arg4[%c0_11, %c0_12, %c0_13] : memref<1x32x2xf32, #tpu.memory_space<vmem>>, vector<1x32x2xf32>
    %27 = vector.shape_cast %26 : vector<1x32x2xf32> to vector<32x2xf32>
    %28 = vector.shape_cast %25 : vector<32x2xf32> to vector<1x32x2xf32>
    tpu.vector_store %arg4[%c0_11, %c0_12, %c0_13], %28 {strides = array<i32>} : memref<1x32x2xf32, #tpu.memory_space<vmem>>, vector<1x32x2xf32>,
    return
  }
  func.func @transform_0(%arg0: i32) -> (i32, i32, i32) {
    %c0_i32 = arith.constant 0 : i32
    %c0_i32_0 = arith.constant 0 : i32
    %c0_i32_1 = arith.constant 0 : i32
    return %arg0, %c0_i32, %c0_i32_0 : i32, i32, i32
  }
  func.func @transform_1(%arg0: i32) -> (i32, i32) {
    %c0_i32 = arith.constant 0 : i32
    %c0_i32_0 = arith.constant 0 : i32
    %c0_i32_1 = arith.constant 0 : i32
    return %c0_i32, %c0_i32_0 : i32, i32
  }
  func.func @transform_2(%arg0: i32) -> (i32, i32) {
    %c0_i32 = arith.constant 0 : i32
    %c0_i32_0 = arith.constant 0 : i32
    %c0_i32_1 = arith.constant 0 : i32
    return %c0_i32, %c0_i32_0 : i32, i32
  }
  func.func @transform_3(%arg0: i32) -> (i32, i32, i32) {
    %c0_i32 = arith.constant 0 : i32
    %c0_i32_0 = arith.constant 0 : i32
    %c0_i32_1 = arith.constant 0 : i32
    return %arg0, %c0_i32, %c0_i32_0 : i32, i32, i32
  }
}

</mosaic_0001>

<llo_original>
// kernel: tpu_custom_call.1
$region0: #{tpu_custom_call.1}
  #allocation0 [shape = 'u32[]', space=smem, size = 0x4, offset = 0x4, fixed_abs, tag = 'smem constant byte address 0x4 - core index']
  #allocation1 [shape = 'u32[144,128]{1,0:T(1,128)}', space=vmem, size = 0x12000, scoped, tag = 'internal scratch']
  %s0 = inlined_call_operand.hbm [shape: f32[8,16,128], index: 0, kind: input, shape index: {}]
  %s1 = inlined_call_operand.vmem [shape: f32[32,48], index: 1, kind: input, shape index: {}]
  %s2 = inlined_call_operand.vmem [shape: f32[32,1], index: 2, kind: input, shape index: {}]
  %s3 = inlined_call_operand.vmem [shape: f32[4,32,2], index: 3, kind: output, shape index: {}]
  %s4 = sld [smem:[#allocation0]]
  $region49: #{tpu_custom_call.1} parent=0
    _
  %s6 = ssub.s32 1, %s4
  %s7 = scalar_select 0, %s6, %s4
  $region1: #{tpu_custom_call.1} parent=0
    #allocation2 [shape = 'u8[32768]{0}', space=vmem, size = 0x8000, scoped, tag = 'input window, operand 0']
    #allocation3 [shape = 's32[2]{0}', space=sflag, size = 0x8, scoped, tag = 'scoped memory for tpu_custom_call.1']
    %8 = vsyncpa [#allocation3], 0
    %s9 = scalar_lea.sflag [#allocation3], 1
    %10 = vsyncpa %s9, 0
    loop: start=0, step=1, limit=6
    $region2: #{tpu_custom_call.1} parent=1 // loop_pre_header
      _
    $region3: #{tpu_custom_call.1} parent=1 // loop_header
      %s12 = sphi 0, %s16
      %p13 = scmp.ge.s32.totalorder %s12, 6
      %s22 = sphi 0, %s24
      %s25 = sphi 0, %s22
      %s26 = sphi 0, %s25
      %s42 = sphi 0, %s26
      %s46 = sphi 0, %s46
      %s48 = sphi 0, %s46
      %s49 = sphi 0, %s48
      %s63 = sphi 0, %s49
      %s67 = sphi 0, %s67
      %s69 = sphi 0, %s67
      %s70 = sphi 0, %s69
      %s84 = sphi 0, %s70
      %s90 = sphi 0, %s92
      %s93 = sphi 0, %s90
      %s94 = sphi 0, %s93
      %s110 = sphi 0, %s94
    $region4: #{tpu_custom_call.1} parent=1 // loop_header_branch
      %15 = sbr.rel (%p13) target = $region8
    $region5: #{tpu_custom_call.1} parent=1 // loop_body
      %s17 = ssub.s32 %s12, 1
      %s18 = ssub.s32 %s12, 2
      %s19 = sadd.s32 %s12, 1
      %s20 = ssub.s32 %s12, %s19
      %p21 = scmp.eq.s32.totalorder %s20, 0
      %s23 = sadd.s32 %s22, 1
      %s24 = scalar_select %p21, %s22, %s23
      %p27 = pneg %p21
      %p28 = scmp.eq.s32.totalorder %s12, 3
      %p29 = por %p27, %p28
      %p30 = scmp.ne.s32.totalorder %s22, %s25
      %p31 = scmp.eq.s32.totalorder %s12, 0
      %p32 = por %p30, %p31
      %p33 = scmp.ne.s32.totalorder %s22, %s25
      %p34 = scmp.eq.s32.totalorder %s17, 3
      %p35 = por %p33, %p34
      %p36 = scmp.ne.s32.totalorder %s25, %s26
      %p37 = scmp.eq.s32.totalorder %s17, 0
      %p38 = por %p36, %p37
      %p39 = scmp.ne.s32.totalorder %s25, %s26
      %p40 = scmp.eq.s32.totalorder %s18, 3
      %p41 = por %p39, %p40
      %p43 = scmp.ne.s32.totalorder %s26, %s42
      %p44 = scmp.eq.s32.totalorder %s18, 0
      %p45 = por %p43, %p44
      %s47 = sadd.s32 %s46, 1
      %p50 = scmp.eq.s32.totalorder %s12, 3
      %p51 = scmp.ne.s32.totalorder %s46, %s48
      %p52 = scmp.eq.s32.totalorder %s12, 0
      %p53 = por %p51, %p52
      %p54 = scmp.ne.s32.totalorder %s46, %s48
      %p55 = scmp.eq.s32.totalorder %s17, 3
      %p56 = por %p54, %p55
      %p57 = scmp.ne.s32.totalorder %s48, %s49
      %p58 = scmp.eq.s32.totalorder %s17, 0
      %p59 = por %p57, %p58
      %p60 = scmp.ne.s32.totalorder %s48, %s49
      %p61 = scmp.eq.s32.totalorder %s18, 3
      %p62 = por %p60, %p61
      %p64 = scmp.ne.s32.totalorder %s49, %s63
      %p65 = scmp.eq.s32.totalorder %s18, 0
      %p66 = por %p64, %p65
      %s68 = sadd.s32 %s67, 1
      %p71 = scmp.eq.s32.totalorder %s12, 3
      %p72 = scmp.ne.s32.totalorder %s67, %s69
      %p73 = scmp.eq.s32.totalorder %s12, 0
      %p74 = por %p72, %p73
      %p75 = scmp.ne.s32.totalorder %s67, %s69
      %p76 = scmp.eq.s32.totalorder %s17, 3
      %p77 = por %p75, %p76
      %p78 = scmp.ne.s32.totalorder %s69, %s70
      %p79 = scmp.eq.s32.totalorder %s17, 0
      %p80 = por %p78, %p79
      %p81 = scmp.ne.s32.totalorder %s69, %s70
      %p82 = scmp.eq.s32.totalorder %s18, 3
      %p83 = por %p81, %p82
      %p85 = scmp.ne.s32.totalorder %s70, %s84
      %p86 = scmp.eq.s32.totalorder %s18, 0
      %p87 = por %p85, %p86
      %s88 = ssub.s32 %s12, %s19
      %p89 = scmp.eq.s32.totalorder %s88, 0
      %s91 = sadd.s32 %s90, 1
      %s92 = scalar_select %p89, %s90, %s91
      %p95 = pneg %p89
      %p96 = scmp.eq.s32.totalorder %s12, 3
      %p97 = por %p95, %p96
      %p98 = scmp.ne.s32.totalorder %s90, %s93
      %p99 = scmp.eq.s32.totalorder %s12, 0
      %p100 = por %p98, %p99
      %p101 = scmp.ne.s32.totalorder %s90, %s93
      %p102 = scmp.eq.s32.totalorder %s17, 3
      %p103 = por %p101, %p102
      %p104 = scmp.ne.s32.totalorder %s93, %s94
      %p105 = scmp.eq.s32.totalorder %s17, 0
      %p106 = por %p104, %p105
      %p107 = scmp.ne.s32.totalorder %s93, %s94
      %p108 = scmp.eq.s32.totalorder %s18, 3
      %p109 = por %p107, %p108
      %p111 = scmp.ne.s32.totalorder %s94, %s110
      %p112 = scmp.eq.s32.totalorder %s18, 0
      %p113 = por %p111, %p112
      %p114 = scmp.le.s32.totalorder 1, %s12
      %p115 = scmp.lt.s32.totalorder %s12, 5
      %p116 = pnand %p114, %p115
      %p117 = pneg %p116
      // Predicated region
      $region9: #{tpu_custom_call.1} parent=5 // pred_check
        _
      $region10: #{tpu_custom_call.1} parent=5 // pred_check_branch
        %119 = sbr.rel (%p116) target = $region12
      $region11: #{tpu_custom_call.1} parent=5 // pred_region
        %s120 = ssub.s32 %s12, 1
        // Predicated region
        $region13: #{tpu_custom_call.1} parent=11 // pred_check
          %p121 = pneg %p59
        $region14: #{tpu_custom_call.1} parent=11 // pred_check_branch
          %123 = sbr.rel (%p121) target = $region16
        $region15: #{tpu_custom_call.1} parent=11 // pred_region
          _
        $region16: #{tpu_custom_call.1} parent=11 // pred_fallthru
          _
        // Predicated region
        $region17: #{tpu_custom_call.1} parent=11 // pred_check
          %p124 = pneg %p80
        $region18: #{tpu_custom_call.1} parent=11 // pred_check_branch
          %126 = sbr.rel (%p124) target = $region20
        $region19: #{tpu_custom_call.1} parent=11 // pred_region
          _
        $region20: #{tpu_custom_call.1} parent=11 // pred_fallthru
          _
      $region12: #{tpu_custom_call.1} parent=5 // pred_fallthru
        _
      %p127 = scmp.lt.s32.totalorder %s12, 4
      // Predicated region
      $region21: #{tpu_custom_call.1} parent=5 // pred_check
        %p128 = pneg %p127
      $region22: #{tpu_custom_call.1} parent=5 // pred_check_branch
        %130 = sbr.rel (%p128) target = $region24
      $region23: #{tpu_custom_call.1} parent=5 // pred_region
        // Predicated region
        $region25: #{tpu_custom_call.1} parent=23 // pred_check
          %p131 = pneg %p32
        $region26: #{tpu_custom_call.1} parent=23 // pred_check_branch
          %133 = sbr.rel (%p131) target = $region28
        $region27: #{tpu_custom_call.1} parent=23 // pred_region
          %s134 = sand.u32 %s22, 1
          %s135 = scalar_lea.sflag [#allocation3], %s134
          %s136 = sand.u32 %s22, 1
          %s137 = smul.addr %s136, 32
          %s138 = scalar_lea.vmem [#allocation2], %s137
          %s139 = smul.u32 2, %s12
          %s141 = ssub.s32 512, 512
          %142 = vsyncadd %s135, %s141
          %s143 = smul.addr %s139, 2
          %s144 = smul.addr %s143, 128
          %s145 = scalar_lea.hbm %s0, %s144
          %s146 = sshll.u32 %s138, 4
          %s147 = int_to_ptr.vmem [resolvable:$true] %s146
          %152 = dma.hbm_to_vmem [thread:$0]  %s145, 512, %s147, %s135, 128, 128, 8
        $region28: #{tpu_custom_call.1} parent=23 // pred_fallthru
          _
      $region24: #{tpu_custom_call.1} parent=5 // pred_fallthru
        _
      %p153 = scmp.le.s32.totalorder 1, %s12
      %p154 = scmp.lt.s32.totalorder %s12, 5
      %p155 = pnand %p153, %p154
      %p156 = pneg %p155
      // Predicated region
      $region29: #{tpu_custom_call.1} parent=5 // pred_check
        _
      $region30: #{tpu_custom_call.1} parent=5 // pred_check_branch
        %158 = sbr.rel (%p155) target = $region32
      $region31: #{tpu_custom_call.1} parent=5 // pred_region
        %s159 = ssub.s32 %s12, 1
        %s160 = sand.u32 %s25, 1
        %s161 = scalar_lea.sflag [#allocation3], %s160
        %s162 = sand.u32 %s25, 1
        %s163 = smul.addr %s162, 32
        %s164 = scalar_lea.vmem [#allocation2], %s163
        // Predicated region
        $region33: #{tpu_custom_call.1} parent=31 // pred_check
          %p165 = pneg %p38
        $region34: #{tpu_custom_call.1} parent=31 // pred_check_branch
          %167 = sbr.rel (%p165) target = $region36
        $region35: #{tpu_custom_call.1} parent=31 // pred_region
          %168 = dma.done %s161, 512
        $region36: #{tpu_custom_call.1} parent=31 // pred_fallthru
          _
        %s169 = sand.u32 %s25, 1
        %s170 = scalar_lea.sflag [#allocation3], %s169
        %s171 = sand.u32 %s25, 1
        %s172 = smul.addr %s171, 32
        %s173 = scalar_lea.vmem [#allocation2], %s172
        %p174 = pneg %p38
        %p175 = pneg %p35
        %p176 = pneg %p59
        %p177 = pneg %p56
        %p178 = pneg %p80
        %p179 = pneg %p77
        %p180 = pneg %p106
        %p181 = pneg %p103
        %p182 = scmp.lt.s32.totalorder %s17, 3
        %s183 = scalar_select %p182, %s17, 3
        %s184 = smul.addr %s183, 4
        %s185 = smul.addr %s184, 8
        %s186 = scalar_lea.vmem %s3, %s185
        %s187 = smul.u32 2, %s17
        %p188 = scmp.lt.s32.totalorder %s17, 3
        %s189 = scalar_select %p188, %s17, 3
        %s190 = smul.addr %s189, 4
        %s191 = smul.addr %s190, 8
        %s192 = scalar_lea.vmem %s3, %s191
        %v193 = vld [vmem:[%s164] sm:$0xff]
        %v194 = vld [vmem:[%s164 + $0x8] sm:$0xff]
        %v195 = vld [vmem:[%s164 + $0x10] sm:$0xff]
        %v196 = vld [vmem:[%s164 + $0x18] sm:$0xff]
        %197 = vrot.lane.b32.xlu0 %v193, 1
        %v198 = vpop.permute.xlu0 %197
        %199 = vrot.lane.b32.xlu0 %v194, 1
        %v200 = vpop.permute.xlu0 %199
        %201 = vrot.lane.b32.xlu0 %v195, 1
        %v202 = vpop.permute.xlu0 %201
        %203 = vrot.lane.b32.xlu0 %v196, 1
        %v204 = vpop.permute.xlu0 %203
        %205 = vrot.lane.b32.xlu0 %v193, 127
        %v206 = vpop.permute.xlu0 %205
        %207 = vrot.lane.b32.xlu0 %v194, 127
        %v208 = vpop.permute.xlu0 %207
        %209 = vrot.lane.b32.xlu0 %v195, 127
        %v210 = vpop.permute.xlu0 %209
        %211 = vrot.lane.b32.xlu0 %v196, 127
        %v212 = vpop.permute.xlu0 %211
        %v213 = vld [vmem:[%s1] sm:$0xff]
        %v214 = vld [vmem:[%s1 + $0x8] sm:$0xff]
        %v215 = vld [vmem:[%s1 + $0x10] sm:$0xff]
        %v216 = vld [vmem:[%s1 + $0x18] sm:$0xff]
        %v217 = vld [vmem:[%s2] sm:$0xff]
        %v218 = vld [vmem:[%s2 + $0x8] sm:$0xff]
        %v219 = vld [vmem:[%s2 + $0x10] sm:$0xff]
        %v220 = vld [vmem:[%s2 + $0x18] sm:$0xff]
        %222 = vset.pattern.permute.xlu0 0
        %223 = vperm.xlu0 %222, %v217
        %v224 = vpop.permute.xlu0 %223
        %227 = vset.pattern.permute.xlu0 0
        %228 = vperm.xlu0 %227, %v218
        %v229 = vpop.permute.xlu0 %228
        %232 = vset.pattern.permute.xlu0 0
        %233 = vperm.xlu0 %232, %v219
        %v234 = vpop.permute.xlu0 %233
        %237 = vset.pattern.permute.xlu0 0
        %238 = vperm.xlu0 %237, %v220
        %v239 = vpop.permute.xlu0 %238
        %vm241 = vcmask 392192
        %v243 = vsel %vm241, %v213, 0
        %v246 = vsel %vm241, %v214, 0
        %v249 = vsel %vm241, %v215, 0
        %v252 = vsel %vm241, %v216, 0
        %254 = vmatprep.subr.mxu0 0.0
        %255 = vmatpush1.msra.mxu0 0.0
        %256 = vmatprep.subr.mxu0 0.0
        %257 = vmatpush1.msra.mxu0 0.0
        %258 = vmatprep.subr.mxu0 0.0
        %259 = vmatpush1.msra.mxu0 0.0
        %260 = vmatprep.subr.mxu0 0.0
        %261 = vmatpush1.msra.mxu0 0.0
        %262 = vmatprep.subr.mxu0 0.0
        %263 = vmatpush1.msra.mxu0 0.0
        %264 = vmatprep.subr.mxu0 0.0
        %265 = vmatpush1.msra.mxu0 0.0
        %266 = vmatprep.subr.mxu0 0.0
        %267 = vmatpush1.msra.mxu0 0.0
        %268 = vmatprep.subr.mxu0 0.0
        %269 = vmatpush1.msra.mxu0 0.0
        %270 = vmatprep.subr.mxu0 0.0
        %271 = vmatpush1.msra.mxu0 0.0
        %272 = vmatprep.subr.mxu0 0.0
        %273 = vmatpush1.msra.mxu0 0.0
        %274 = vmatprep.subr.mxu0 %v212
        %275 = vmatpush1.msra.mxu0 %v208
        %276 = vmatprep.subr.mxu0 %v210
        %277 = vmatpush1.msra.mxu0 %v206
        %278 = vmatprep.subr.mxu0 %v196
        %279 = vmatpush1.msra.mxu0 %v194
        %280 = vmatprep.subr.mxu0 %v195
        %281 = vmatpush1.msra.mxu0 %v193
        %282 = vmatprep.subr.mxu0 %v204
        %283 = vmatpush1.msra.mxu0 %v200
        %284 = vmatprep.subr.mxu0 %v202
        %285 = vmatpush1.msra.mxu0 %v198
        %286 = vmatprep.subr.mxu0 0.0
        %287 = vmatpush2.msra.mxu0 0.0
        %288 = vmatprep.subr.mxu0 0.0
        %289 = vmatpush2.msra.mxu0 0.0
        %290 = vmatprep.subr.mxu0 0.0
        %291 = vmatpush2.msra.mxu0 0.0
        %292 = vmatprep.subr.mxu0 0.0
        %293 = vmatpush2.msra.mxu0 0.0
        %294 = vmatprep.subr.mxu0 0.0
        %295 = vmatpush2.msra.mxu0 0.0
        %296 = vmatprep.subr.mxu0 0.0
        %297 = vmatpush2.msra.mxu0 0.0
        %298 = vmatprep.subr.mxu0 0.0
        %299 = vmatpush2.msra.mxu0 0.0
        %300 = vmatprep.subr.mxu0 0.0
        %301 = vmatpush2.msra.mxu0 0.0
        %302 = vmatprep.subr.mxu0 0.0
        %303 = vmatpush2.msra.mxu0 0.0
        %304 = vmatprep.subr.mxu0 0.0
        %305 = vmatpush2.msra.mxu0 0.0
        %306 = vmatprep.subr.mxu0 0.0
        %307 = vmatpush2.msra.mxu0 0.0
        %308 = vmatprep.subr.mxu0 0.0
        %309 = vmatpush2.msra.mxu0 0.0
        %310 = vmatprep.subr.mxu0 0.0
        %311 = vmatpush2.msra.mxu0 0.0
        %312 = vmatprep.subr.mxu0 0.0
        %313 = vmatpush2.msra.mxu0 0.0
        %314 = vmatprep.subr.mxu0 0.0
        %315 = vmatpush2.msra.mxu0 0.0
        %316 = vmatprep.subr.mxu0 0.0
        %317 = vmatpush2.msra.mxu0 0.0
        %318 = vmatprep.mubr.f32.mxu0 0.0
        %319 = vmatmul.mubr.f32.gmra.mxu0 %v243
        %v320 = vpop.f32.mrf.mxu0
        %v321 = vadd.f32 %v224, %v320
        %v322 = vpop.f32.mrf.mxu0
        %v323 = vadd.f32 %v224, %v322
        %324 = vmatprep.mubr.f32.mxu0 0.0
        %325 = vmatmul.mubr.f32.gmra.mxu0 %v246
        %v326 = vpop.f32.mrf.mxu0
        %v327 = vadd.f32 %v229, %v326
        %v328 = vpop.f32.mrf.mxu0
        %v329 = vadd.f32 %v229, %v328
        %330 = vmatprep.mubr.f32.mxu0 0.0
        %331 = vmatmul.mubr.f32.gmra.mxu0 %v249
        %v332 = vpop.f32.mrf.mxu0
        %v333 = vadd.f32 %v234, %v332
        %v334 = vpop.f32.mrf.mxu0
        %v335 = vadd.f32 %v234, %v334
        %336 = vmatprep.mubr.f32.mxu0 0.0
        %337 = vmatmul.mubr.f32.gmra.mxu0 %v252
        %v338 = vpop.f32.mrf.mxu0
        %v339 = vadd.f32 %v239, %v338
        %v340 = vpop.f32.mrf.mxu0
        %v341 = vadd.f32 %v239, %v340
        %342 = vdwg.mxu0
        %v343 = vmax.f32 %v321, 0.0
        %v344 = vmax.f32 %v323, 0.0
        %v345 = vmax.f32 %v327, 0.0
        %v346 = vmax.f32 %v329, 0.0
        %v347 = vmax.f32 %v333, 0.0
        %v348 = vmax.f32 %v335, 0.0
        %v349 = vmax.f32 %v339, 0.0
        %v350 = vmax.f32 %v341, 0.0
        %v351 = vadd.f32 %v343, %v344
        %352 = vadd.xlane.f32.xlu0 %v351
        %v353 = vpop.xlane.xlu0 %352
        %v354 = vadd.f32 %v345, %v346
        %355 = vadd.xlane.f32.xlu0 %v354
        %v356 = vpop.xlane.xlu0 %355
        %v357 = vadd.f32 %v347, %v348
        %358 = vadd.xlane.f32.xlu0 %v357
        %v359 = vpop.xlane.xlu0 %358
        %v360 = vadd.f32 %v349, %v350
        %361 = vadd.xlane.f32.xlu0 %v360
        %v362 = vpop.xlane.xlu0 %361
        %v363 = vmul.f32 %v343, %v343
        %v364 = vmul.f32 %v344, %v344
        %v365 = vmul.f32 %v345, %v345
        %v366 = vmul.f32 %v346, %v346
        %v367 = vmul.f32 %v347, %v347
        %v368 = vmul.f32 %v348, %v348
        %v369 = vmul.f32 %v349, %v349
        %v370 = vmul.f32 %v350, %v350
        %v371 = vadd.f32 %v363, %v364
        %372 = vadd.xlane.f32.xlu0 %v371
        %v373 = vpop.xlane.xlu0 %372
        %v374 = vadd.f32 %v365, %v366
        %375 = vadd.xlane.f32.xlu0 %v374
        %v376 = vpop.xlane.xlu0 %375
        %v377 = vadd.f32 %v367, %v368
        %378 = vadd.xlane.f32.xlu0 %v377
        %v379 = vpop.xlane.xlu0 %378
        %v380 = vadd.f32 %v369, %v370
        %381 = vadd.xlane.f32.xlu0 %v380
        %v382 = vpop.xlane.xlu0 %381
        %vm383 = vcmask 7168
        %v384 = vsel %vm383, %v353, %v373
        %v385 = vsel %vm383, %v356, %v376
        %v386 = vsel %vm383, %v359, %v379
        %v387 = vsel %vm383, %v362, %v382
        %vm388 = vcmask 15360
        %389 = vst.msk [vmem:[%s192] sm:$0xff] %vm388, %v384
        %390 = vst.msk [vmem:[%s192 + $0x8] sm:$0xff] %vm388, %v385
        %391 = vst.msk [vmem:[%s192 + $0x10] sm:$0xff] %vm388, %v386
        %392 = vst.msk [vmem:[%s192 + $0x18] sm:$0xff] %vm388, %v387
        %p393 = scmp.lt.s32.totalorder %s17, 3
        %s394 = scalar_select %p393, %s17, 3
        %s395 = smul.addr %s394, 4
        %s396 = smul.addr %s395, 8
        %s397 = scalar_lea.vmem %s3, %s396
        // Predicated region
        $region37: #{tpu_custom_call.1} parent=31 // pred_check
          %p398 = pneg %p103
        $region38: #{tpu_custom_call.1} parent=31 // pred_check_branch
          %400 = sbr.rel (%p398) target = $region40
        $region39: #{tpu_custom_call.1} parent=31 // pred_region
          _
        $region40: #{tpu_custom_call.1} parent=31 // pred_fallthru
          _
      $region32: #{tpu_custom_call.1} parent=5 // pred_fallthru
        _
      %p401 = scmp.le.s32.totalorder 2, %s12
      // Predicated region
      $region41: #{tpu_custom_call.1} parent=5 // pred_check
        %p402 = pneg %p401
      $region42: #{tpu_custom_call.1} parent=5 // pred_check_branch
        %404 = sbr.rel (%p402) target = $region44
      $region43: #{tpu_custom_call.1} parent=5 // pred_region
        %s405 = ssub.s32 %s12, 2
        // Predicated region
        $region45: #{tpu_custom_call.1} parent=43 // pred_check
          %p406 = pneg %p109
        $region46: #{tpu_custom_call.1} parent=43 // pred_check_branch
          %408 = sbr.rel (%p406) target = $region48
        $region47: #{tpu_custom_call.1} parent=43 // pred_region
          %p409 = scmp.lt.s32.totalorder %s18, 3
          %s410 = scalar_select %p409, %s18, 3
          %s411 = smul.addr %s410, 4
          %s412 = smul.addr %s411, 8
          %s413 = scalar_lea.vmem %s3, %s412
        $region48: #{tpu_custom_call.1} parent=43 // pred_fallthru
          _
      $region44: #{tpu_custom_call.1} parent=5 // pred_fallthru
        _
    $region6: #{tpu_custom_call.1} parent=1 // loop_footer
      %s16 = sadd.s32 1, %s12
    $region7: #{tpu_custom_call.1} parent=1 // loop_footer_branch
      %11 = sbr.rel target = $region3
    $region8: #{tpu_custom_call.1} parent=1 // loop_exit
      _
    %414 = vsyncpa [#allocation3], 1
    %s415 = scalar_lea.sflag [#allocation3], 1
    %416 = vsyncpa %s415, 1

</llo_original>
